<compile_context>
chip_gen: v7x
topology: tpu7x:2x2x1
jax: 0.10.0
libtpu: 0.0.40
codegen_flags: <defaults>
</compile_context>

<pallas_src>
import functools
import math

import jax
import jax.numpy as jnp
from jax.experimental import pallas as pl
from jax.experimental.pallas import tpu as pltpu

_LANE = 128


def _round_up(x: int, m: int) -> int:
    return ((x + m - 1) // m) * m


def _round_down(x: int, m: int) -> int:
    return (x // m) * m


def _cdiv(x: int, m: int) -> int:
    return (x + m - 1) // m


def _sublane(dtype) -> int:
    # Sublane packing granularity: 8 rows for 4-byte, 16 for 2-byte, 32 for 1-byte.
    return max(8, 32 // jnp.dtype(dtype).itemsize)


def _integration_kernel(x_ref, c_ref, o_ref, *, a: float, b: float):
    # Stream native-dtype tiles; compute in f32 (VPU FMAs + cos), write back
    # in the output's native dtype.  Pure HBM-streaming elementwise kernel.
    x = x_ref[...].astype(jnp.float32)
    c = c_ref[...].astype(jnp.float32)
    o_ref[...] = jnp.cos(a * x + b * c).astype(o_ref.dtype)


def integration_nn_module(a, b, x, c, *,
                          target_block_bytes: int = 2 * 1024 * 1024,
                          canonical_width: int = 8192) -> jnp.ndarray:
    """cos(a*x + b*c) for arbitrary-shape elementwise inputs via a Pallas TPU kernel."""
    x = jnp.asarray(x)
    c = jnp.asarray(c)
    x, c = jnp.broadcast_arrays(x, c)
    out_dtype = jnp.promote_types(x.dtype, c.dtype)
    orig_shape = x.shape
    n = math.prod(orig_shape) if orig_shape else 1
    if n == 0:
        return jnp.zeros(orig_shape, out_dtype)

    # ---- canonical lane-dense slab [rows, width], width a multiple of 128 ----
    if n <= canonical_width:
        width = _round_up(n, _LANE)
    else:
        width = canonical_width            # multiple of 128 by construction
    n_pad = _round_up(n, width)
    rows = n_pad // width

    xf = x.reshape(-1)
    cf = c.reshape(-1)
    if n_pad != n:
        # cos(0) on the tail is harmless; it is sliced off below.
        xf = jnp.pad(xf, (0, n_pad - n))
        cf = jnp.pad(cf, (0, n_pad - n))
    x2 = xf.reshape(rows, width)
    c2 = cf.reshape(rows, width)

    # ---- row-strip tiling that always respects the per-block byte budget ----
    x_bytes = jnp.dtype(x2.dtype).itemsize
    c_bytes = jnp.dtype(c2.dtype).itemsize
    o_bytes = jnp.dtype(out_dtype).itemsize
    elem_bytes = max(x_bytes, c_bytes, o_bytes)
    sub = max(_sublane(x2.dtype), _sublane(c2.dtype), _sublane(out_dtype))

    row_bytes = width * elem_bytes
    budget_rows = max(1, target_block_bytes // row_bytes)
    tile_r = _round_down(budget_rows, sub)
    if tile_r == 0:
        # width is capped at canonical_width, so `sub` rows is still a small
        # block (<= ~256 KiB); this cannot blow the VMEM budget.
        tile_r = sub
    tile_r = min(tile_r, rows)

    # v7x: keep >= ~4 grid steps on mid/large problems so the "parallel" axis
    # can be sharded across both TensorCores instead of one block on one core.
    total_bytes = rows * row_bytes
    if tile_r == rows and total_bytes > 512 * 1024 and rows >= 2 * sub:
        tile_r = max(sub, _round_down(_cdiv(rows, 4), sub))
        tile_r = min(tile_r, rows)

    grid = (_cdiv(rows, tile_r),)
    spec = pl.BlockSpec((tile_r, width), lambda i: (i, 0))

    cost = pl.CostEstimate(
        flops=4 * n_pad,                       # ~2 muls + 1 add per element
        transcendentals=n_pad,                 # one cos per element
        bytes_accessed=n_pad * (x_bytes + c_bytes + o_bytes),
    )

    # 2 inputs + 1 output, double-buffered.
    est_vmem = 2 * tile_r * width * (x_bytes + c_bytes + o_bytes)
    cp_kwargs = dict(dimension_semantics=("parallel",))
    if est_vmem > 12 * 1024 * 1024:
        cp_kwargs["vmem_limit_bytes"] = min(48 * 1024 * 1024, 2 * est_vmem)

    kernel = functools.partial(_integration_kernel, a=float(a), b=float(b))
    out2 = pl.pallas_call(
        kernel,
        out_shape=jax.ShapeDtypeStruct((rows, width), out_dtype),
        grid=grid,
        in_specs=[spec, spec],
        out_specs=pl.BlockSpec((tile_r, width), lambda i: (i, 0)),
        compiler_params=pltpu.CompilerParams(**cp_kwargs),
        cost_estimate=cost,
    )(x2, c2)

    out_flat = out2.reshape(-1)
    if n_pad != n:
        out_flat = out_flat[:n]
    return out_flat.reshape(orig_shape)


if __name__ == "__main__":
    key = jax.random.PRNGKey(0)
    k1, k2, k3, k4, k5, k6 = jax.random.split(key, 6)

    # Fixed module "parameters".
    a, b = 2.0, -0.5

    # 1) Small 4-D shape (module is elementwise / shape-agnostic): single block.
    x = jax.random.normal(k1, (2, 4, 16, 16), dtype=jnp.float32)
    c = jax.random.normal(k2, (2, 4, 16, 16), dtype=jnp.float32)
    out = jax.block_until_ready(integration_nn_module(a, b, x, c))
    ref = jnp.cos(a * x + b * c)
    assert jnp.allclose(out, ref, atol=1e-5, rtol=1e-5), "f32 mismatch"

    # 2) Non-128-divisible element count: exercises the lane-dense pad path.
    x2 = jax.random.normal(k3, (130, 100), dtype=jnp.float32)
    c2 = jax.random.normal(k4, (130, 100), dtype=jnp.float32)
    out2 = jax.block_until_ready(integration_nn_module(a, b, x2, c2))
    ref2 = jnp.cos(a * x2 + b * c2)
    assert jnp.allclose(out2, ref2, atol=1e-5, rtol=1e-5), "pad-path mismatch"

    # 3) Native bf16 streaming + forced multi-block tiling (small block budget).
    xb = jax.random.normal(k5, (64, 8192), dtype=jnp.bfloat16)
    cb = jax.random.normal(k6, (64, 8192), dtype=jnp.bfloat16)
    outb = jax.block_until_ready(
        integration_nn_module(a, b, xb, cb, target_block_bytes=256 * 1024))
    refb = jnp.cos(a * xb.astype(jnp.float32)
                   + b * cb.astype(jnp.float32)).astype(jnp.bfloat16)
    assert jnp.allclose(outb.astype(jnp.float32), refb.astype(jnp.float32),
                        atol=2e-2, rtol=2e-2), "bf16 mismatch"

    print("KERNEL_OK")
</pallas_src>

<mosaic_0001>
module attributes {stable_mosaic.version = 11 : i64} {
  func.func @_integration_kernel(%arg0: i32, %arg1: memref<1x2048xf32, #tpu.memory_space<vmem>>, %arg2: memref<1x2048xf32, #tpu.memory_space<vmem>>, %arg3: memref<1x2048xf32, #tpu.memory_space<vmem>>) attributes {dimension_semantics = [#tpu.dimension_semantics<parallel>], iteration_bounds = array<i64: 1>, scalar_prefetch = 0 : i64, scratch_operands = 0 : i64, tpu.core_type = #tpu.core_type<tc>, window_params = [{transform_indices = @transform_0, window_bounds = array<i64: 1, 2048>}, {transform_indices = @transform_1, window_bounds = array<i64: 1, 2048>}, {transform_indices = @transform_2, window_bounds = array<i64: 1, 2048>}]} {
    %c0 = arith.constant 0 : index
    %c0_0 = arith.constant 0 : index
    %0 = vector.load %arg1[%c0, %c0_0] : memref<1x2048xf32, #tpu.memory_space<vmem>>, vector<1x2048xf32>
    %c0_1 = arith.constant 0 : index
    %c0_2 = arith.constant 0 : index
    %1 = vector.load %arg2[%c0_1, %c0_2] : memref<1x2048xf32, #tpu.memory_space<vmem>>, vector<1x2048xf32>
    %cst = arith.constant 2.000000e+00 : f32
    %2 = vector.broadcast %cst : f32 to vector<1x2048xf32>
    %3 = arith.mulf %2, %0 : vector<1x2048xf32>
    %cst_3 = arith.constant -5.000000e-01 : f32
    %4 = vector.broadcast %cst_3 : f32 to vector<1x2048xf32>
    %5 = arith.mulf %4, %1 : vector<1x2048xf32>
    %6 = arith.addf %3, %5 : vector<1x2048xf32>
    %7 = math.cos %6 : vector<1x2048xf32>
    %c0_4 = arith.constant 0 : index
    %c0_5 = arith.constant 0 : index
    %8 = vector.load %arg3[%c0_4, %c0_5] : memref<1x2048xf32, #tpu.memory_space<vmem>>, vector<1x2048xf32>
    tpu.vector_store %arg3[%c0_4, %c0_5], %7 {strides = array<i32>} : memref<1x2048xf32, #tpu.memory_space<vmem>>, vector<1x2048xf32>,
    return
  }
  func.func @transform_0(%arg0: i32) -> (i32, i32) {
    %c0_i32 = arith.constant 0 : i32
    %c0_i32_0 = arith.constant 0 : i32
    return %arg0, %c0_i32 : i32, i32
  }
  func.func @transform_1(%arg0: i32) -> (i32, i32) {
    %c0_i32 = arith.constant 0 : i32
    %c0_i32_0 = arith.constant 0 : i32
    return %arg0, %c0_i32 : i32, i32
  }
  func.func @transform_2(%arg0: i32) -> (i32, i32) {
    %c0_i32 = arith.constant 0 : i32
    %c0_i32_0 = arith.constant 0 : i32
    return %arg0, %c0_i32 : i32, i32
  }
}

</mosaic_0001>

<llo_original>
// kernel: tpu_custom_call.1
$region0: #{tpu_custom_call.1}
  #allocation0 [shape = 'u32[]', space=smem, size = 0x4, offset = 0x4, fixed_abs, tag = 'smem constant byte address 0x4 - core index']
  #allocation1 [shape = 'u32[144,128]{1,0:T(1,128)}', space=vmem, size = 0x12000, scoped, tag = 'internal scratch']
  %s0 = inlined_call_operand.hbm [shape: f32[1,2048], index: 0, kind: input, shape index: {}]
  %s1 = inlined_call_operand.hbm [shape: f32[1,2048], index: 1, kind: input, shape index: {}]
  %s2 = inlined_call_operand.hbm [shape: f32[1,2048], index: 2, kind: output, shape index: {}]
  %s3 = sld [smem:[#allocation0]]
  $region26: #{tpu_custom_call.1} parent=0
    _
  %s5 = ssub.s32 1, %s3
  %s6 = scalar_select 0, %s5, %s3
  $region1: #{tpu_custom_call.1} parent=0
    #allocation2 [shape = 'u8[8192]{0}', space=vmem, size = 0x2000, scoped, tag = 'input window, operand 0, single buffered']
    #allocation3 [shape = 's32[1]{0}', space=sflag, size = 0x4, scoped, tag = 'scoped memory for tpu_custom_call.1']
    #allocation4 [shape = 's32[1]{0}', space=sflag, size = 0x4, scoped, tag = 'scoped memory for tpu_custom_call.1']
    #allocation5 [shape = 'u8[8192]{0}', space=vmem, size = 0x2000, scoped, tag = 'input window, operand 1, single buffered']
    #allocation6 [shape = 's32[1]{0}', space=sflag, size = 0x4, scoped, tag = 'scoped memory for tpu_custom_call.1']
    #allocation7 [shape = 'u8[8192]{0}', space=vmem, size = 0x2000, scoped, tag = 'output window, operand 0, single buffered']
    %7 = vsyncpa [#allocation3], 0
    %8 = vsyncpa [#allocation6], 0
    %9 = vsyncpa [#allocation4], 0
    // Predicated region
    $region2: #{tpu_custom_call.1} parent=1 // pred_check
      _
    $region3: #{tpu_custom_call.1} parent=1 // pred_check_branch
      %11 = sbr.rel (0) target = $region5
    $region4: #{tpu_custom_call.1} parent=1 // pred_region
      %s13 = ssub.s32 256, 256
      %14 = vsyncadd [#allocation3], %s13
      %s16 = sshll.u32 [#allocation2], 4
      %s17 = int_to_ptr.vmem [resolvable:$true] %s16
      %19 = dma.hbm_to_vmem [thread:$0]  %s0, 256, %s17, [#allocation3]
    $region5: #{tpu_custom_call.1} parent=1 // pred_fallthru
      _
    // Predicated region
    $region6: #{tpu_custom_call.1} parent=1 // pred_check
      _
    $region7: #{tpu_custom_call.1} parent=1 // pred_check_branch
      %21 = sbr.rel (0) target = $region9
    $region8: #{tpu_custom_call.1} parent=1 // pred_region
      %s23 = ssub.s32 256, 256
      %24 = vsyncadd [#allocation6], %s23
      %s26 = sshll.u32 [#allocation5], 4
      %s27 = int_to_ptr.vmem [resolvable:$true] %s26
      %29 = dma.hbm_to_vmem [thread:$0]  %s1, 256, %s27, [#allocation6]
    $region9: #{tpu_custom_call.1} parent=1 // pred_fallthru
      _
    // Predicated region
    $region10: #{tpu_custom_call.1} parent=1 // pred_check
      _
    $region11: #{tpu_custom_call.1} parent=1 // pred_check_branch
      %31 = sbr.rel (0) target = $region13
    $region12: #{tpu_custom_call.1} parent=1 // pred_region
      %32 = dma.done [#allocation3], 256
    $region13: #{tpu_custom_call.1} parent=1 // pred_fallthru
      _
    // Predicated region
    $region14: #{tpu_custom_call.1} parent=1 // pred_check
      _
    $region15: #{tpu_custom_call.1} parent=1 // pred_check_branch
      %34 = sbr.rel (0) target = $region17
    $region16: #{tpu_custom_call.1} parent=1 // pred_region
      %35 = dma.done [#allocation6], 256
    $region17: #{tpu_custom_call.1} parent=1 // pred_fallthru
      _
    %v36 = vld [vmem:[#allocation2] sm:$0xff]
    %v37 = vld [vmem:[#allocation2 + $0x8] sm:$0xff]
    %v38 = vld [vmem:[#allocation5] sm:$0xff]
    %v39 = vld [vmem:[#allocation5 + $0x8] sm:$0xff]
    %v40 = vmul.f32 %v36, 2.0
    %v41 = vmul.f32 %v37, 2.0
    %v42 = vmul.f32 %v38, -0.5
    %v43 = vmul.f32 %v39, -0.5
    %v44 = vadd.f32 %v40, %v42
    %v45 = vadd.f32 %v41, %v43
    %v46 = vand.u32 2147483647, %v44
    %vm47 = vcmp.le.f32.partialorder %v46, 0.7853982
    %vm48 = vcmp.lt.s32.totalorder %v44, 0
    %v49 = vand.u32 %v44, 2139095040
    %v50 = vshrl.u32 %v49, 23
    %v51 = vsub.s32 %v50, 127
    %v52 = vand.u32 2147483647, %v44
    %v53 = vand.u32 %v52, 8388607
    %v54 = vor.u32 %v53, 8388608
    %v55 = vsub.s32 0, %v54
    %v56 = vadd.s32 %v51, 1
    %vm57 = vcmp.gt.s32.totalorder %v56, 0
    %v58 = vsel %vm57, %v56, 0
    %v59 = vshrl.u32 %v58, 5
    %v60 = vand.u32 %v58, 31
    %v61 = vsub.s32 32, %v60
    %v62 = vshrl.u32 683565275, %v61
    %v63 = vshll.u32 683565275, %v60
    %v64 = vshrl.u32 2475754826, %v61
    %v65 = vor.u32 %v63, %v64
    %v66 = vshll.u32 2475754826, %v60
    %v67 = vshrl.u32 2131351028, %v61
    %v68 = vor.u32 %v66, %v67
    %v69 = vshll.u32 2131351028, %v60
    %v70 = vshrl.u32 2102212464, %v61
    %v71 = vor.u32 %v69, %v70
    %v72 = vshll.u32 2102212464, %v60
    %v73 = vshrl.u32 920167782, %v61
    %v74 = vor.u32 %v72, %v73
    %v75 = vshll.u32 920167782, %v60
    %v76 = vshrl.u32 1326507024, %v61
    %v77 = vor.u32 %v75, %v76
    %vm78 = vcmp.lt.s32.totalorder %v59, 1
    %vm79 = vcmp.lt.s32.totalorder %v59, 2
    %vm80 = vcmp.lt.s32.totalorder %v59, 3
    %vm81 = vcmp.lt.s32.totalorder %v59, 4
    %v82 = vsel %vm78, %v62, %v65
    %v83 = vsel %vm81, %v71, 2102212464
    %v84 = vsel %vm80, %v68, %v83
    %v85 = vsel %vm79, %v82, %v84
    %v86 = vsel %vm78, %v65, %v68
    %v87 = vsel %vm81, %v74, 920167782
    %v88 = vsel %vm80, %v71, %v87
    %v89 = vsel %vm79, %v86, %v88
    %v90 = vsel %vm78, %v68, %v71
    %v91 = vsel %vm81, %v77, 1326507024
    %v92 = vsel %vm80, %v74, %v91
    %v93 = vsel %vm79, %v90, %v92
    %v94 = vshll.u32 %v54, 8
    %v95 = vmul.u32.u64.compose %v94, %v93
    %v96 = vextract.low.u32 %v95
    %v97 = vextract.high.u32 %v95
    %v98 = vmul.u32.u64.compose %v94, %v89
    %v99 = vextract.low.u32 %v98
    %v100 = vextract.high.u32 %v98
    %v101 = vmul.u32 %v94, %v85
    %v102 = vadd.s32 %v97, %v99
    %vm103 = vc.u32 %v97, %v99
    %v104 = vadd.s32 %v100, 1
    %v105 = vsel %vm103, %v104, %v100
    %v106 = vadd.s32 %v101, %v105
    %v107 = vadd.s32 %v106, 536870912
    %v108 = vshrl.u32 %v107, 30
    %v109 = vshll.u32 %v108, 30
    %v110 = vsub.s32 %v106, %v109
    %vm111 = vcmp.lt.s32.totalorder %v110, 0
    %v112 = vsub.s32 0, %v110
    %v113 = vsel %vm111, %v112, %v110
    %v114 = vclz %v113
    %v115 = vsub.s32 %v114, 2
    %vm116 = vcmp.gt.s32.totalorder 0, %v115
    %v117 = vsel %vm116, 0, %v115
    %v118 = vsub.s32 32, %v117
    %v119 = vshll.u32 %v110, %v117
    %v120 = vshrl.u32 %v102, %v118
    %v121 = vor.u32 %v119, %v120
    %v122 = vsub.s32 4294967266, %v117
    %v123 = vadd.s32 %v122, 127
    %v124 = vshll.u32 %v123, 23
    %v125 = vor.u32 4788187, %v124
    %v126 = vand.u32 2147483647, %v125
    %v128 = vcvt.s32.f32 %v121
    %v129 = vmul.f32 %v128, %v126
    %v130 = vxor.u32 %v129, 2147483648
    %v131 = vsel %vm48, %v130, %v129
    %v132 = vsub.s32 4, %v108
    %v133 = vsel %vm48, %v132, %v108
    %v134 = vsel %vm47, %v44, %v131
    %v135 = vsel %vm47, 0, %v133
    %v136 = vcosq.f32.pop %v134
    %v137 = vsinq.f32.pop %v134
    %vm138 = vweird.f32 %v44
    %v139 = vand.u32 %v135, 3
    %vm140 = vcmp.lt.s32.totalorder %v139, 2
    %vm141 = vcmp.eq.s32.totalorder %v139, 0
    %v142 = vxor.u32 %v137, 2147483648
    %v143 = vsel %vm141, %v136, %v142
    %vm144 = vcmp.eq.s32.totalorder %v139, 2
    %v145 = vxor.u32 %v136, 2147483648
    %v146 = vsel %vm144, %v145, %v137
    %v147 = vsel %vm140, %v143, %v146
    %v148 = vsel %vm138, nan, %v147
    %v149 = vand.u32 2147483647, %v45
    %vm150 = vcmp.le.f32.partialorder %v149, 0.7853982
    %vm151 = vcmp.lt.s32.totalorder %v45, 0
    %v152 = vand.u32 %v45, 2139095040
    %v153 = vshrl.u32 %v152, 23
    %v154 = vsub.s32 %v153, 127
    %v155 = vand.u32 2147483647, %v45
    %v156 = vand.u32 %v155, 8388607
    %v157 = vor.u32 %v156, 8388608
    %v158 = vsub.s32 0, %v157
    %v159 = vadd.s32 %v154, 1
    %vm160 = vcmp.gt.s32.totalorder %v159, 0
    %v161 = vsel %vm160, %v159, 0
    %v162 = vshrl.u32 %v161, 5
    %v163 = vand.u32 %v161, 31
    %v164 = vsub.s32 32, %v163
    %v165 = vshrl.u32 683565275, %v164
    %v166 = vshll.u32 683565275, %v163
    %v167 = vshrl.u32 2475754826, %v164
    %v168 = vor.u32 %v166, %v167
    %v169 = vshll.u32 2475754826, %v163
    %v170 = vshrl.u32 2131351028, %v164
    %v171 = vor.u32 %v169, %v170
    %v172 = vshll.u32 2131351028, %v163
    %v173 = vshrl.u32 2102212464, %v164
    %v174 = vor.u32 %v172, %v173
    %v175 = vshll.u32 2102212464, %v163
    %v176 = vshrl.u32 920167782, %v164
    %v177 = vor.u32 %v175, %v176
    %v178 = vshll.u32 920167782, %v163
    %v179 = vshrl.u32 1326507024, %v164
    %v180 = vor.u32 %v178, %v179
    %vm181 = vcmp.lt.s32.totalorder %v162, 1
    %vm182 = vcmp.lt.s32.totalorder %v162, 2
    %vm183 = vcmp.lt.s32.totalorder %v162, 3
    %vm184 = vcmp.lt.s32.totalorder %v162, 4
    %v185 = vsel %vm181, %v165, %v168
    %v186 = vsel %vm184, %v174, 2102212464
    %v187 = vsel %vm183, %v171, %v186
    %v188 = vsel %vm182, %v185, %v187
    %v189 = vsel %vm181, %v168, %v171
    %v190 = vsel %vm184, %v177, 920167782
    %v191 = vsel %vm183, %v174, %v190
    %v192 = vsel %vm182, %v189, %v191
    %v193 = vsel %vm181, %v171, %v174
    %v194 = vsel %vm184, %v180, 1326507024
    %v195 = vsel %vm183, %v177, %v194
    %v196 = vsel %vm182, %v193, %v195
    %v197 = vshll.u32 %v157, 8
    %v198 = vmul.u32.u64.compose %v197, %v196
    %v199 = vextract.low.u32 %v198
    %v200 = vextract.high.u32 %v198
    %v201 = vmul.u32.u64.compose %v197, %v192
    %v202 = vextract.low.u32 %v201
    %v203 = vextract.high.u32 %v201
    %v204 = vmul.u32 %v197, %v188
    %v205 = vadd.s32 %v200, %v202
    %vm206 = vc.u32 %v200, %v202
    %v207 = vadd.s32 %v203, 1
    %v208 = vsel %vm206, %v207, %v203
    %v209 = vadd.s32 %v204, %v208
    %v210 = vadd.s32 %v209, 536870912
    %v211 = vshrl.u32 %v210, 30
    %v212 = vshll.u32 %v211, 30
    %v213 = vsub.s32 %v209, %v212
    %vm214 = vcmp.lt.s32.totalorder %v213, 0
    %v215 = vsub.s32 0, %v213
    %v216 = vsel %vm214, %v215, %v213
    %v217 = vclz %v216
    %v218 = vsub.s32 %v217, 2
    %vm219 = vcmp.gt.s32.totalorder 0, %v218
    %v220 = vsel %vm219, 0, %v218
    %v221 = vsub.s32 32, %v220
    %v222 = vshll.u32 %v213, %v220
    %v223 = vshrl.u32 %v205, %v221
    %v224 = vor.u32 %v222, %v223
    %v225 = vsub.s32 4294967266, %v220
    %v226 = vadd.s32 %v225, 127
    %v227 = vshll.u32 %v226, 23
    %v228 = vor.u32 4788187, %v227
    %v229 = vand.u32 2147483647, %v228
    %v231 = vcvt.s32.f32 %v224
    %v232 = vmul.f32 %v231, %v229
    %v233 = vxor.u32 %v232, 2147483648
    %v234 = vsel %vm151, %v233, %v232
    %v235 = vsub.s32 4, %v211
    %v236 = vsel %vm151, %v235, %v211
    %v237 = vsel %vm150, %v45, %v234
    %v238 = vsel %vm150, 0, %v236
    %v239 = vcosq.f32.pop %v237
    %v240 = vsinq.f32.pop %v237
    %vm241 = vweird.f32 %v45
    %v242 = vand.u32 %v238, 3
    %vm243 = vcmp.lt.s32.totalorder %v242, 2
    %vm244 = vcmp.eq.s32.totalorder %v242, 0
    %v245 = vxor.u32 %v240, 2147483648
    %v246 = vsel %vm244, %v239, %v245
    %vm247 = vcmp.eq.s32.totalorder %v242, 2
    %v248 = vxor.u32 %v239, 2147483648
    %v249 = vsel %vm247, %v248, %v240
    %v250 = vsel %vm243, %v246, %v249
    %v251 = vsel %vm241, nan, %v250
    %252 = vst [vmem:[#allocation7] sm:$0xff] %v148
    %253 = vst [vmem:[#allocation7 + $0x8] sm:$0xff] %v251
    // Predicated region
    $region18: #{tpu_custom_call.1} parent=1 // pred_check
      _
    $region19: #{tpu_custom_call.1} parent=1 // pred_check_branch
      %255 = sbr.rel (0) target = $region21
    $region20: #{tpu_custom_call.1} parent=1 // pred_region
      %s257 = ssub.s32 256, 256
      %258 = vsyncadd [#allocation4], %s257
      %s260 = sshll.u32 [#allocation7], 4
      %s261 = int_to_ptr.vmem [resolvable:$true] %s260
      %263 = dma.vmem_to_hbm [thread:$0]  %s261, 256, %s2, [#allocation4]
    $region21: #{tpu_custom_call.1} parent=1 // pred_fallthru
      _
    // Predicated region
    $region22: #{tpu_custom_call.1} parent=1 // pred_check
      _
    $region23: #{tpu_custom_call.1} parent=1 // pred_check_branch
      %265 = sbr.rel (0) target = $region25
    $region24: #{tpu_custom_call.1} parent=1 // pred_region
      %266 = dma.done [#allocation4], 256
    $region25: #{tpu_custom_call.1} parent=1 // pred_fallthru
      _
    %267 = vsyncpa [#allocation3], 1
    %268 = vsyncpa [#allocation6], 1
    %269 = vsyncpa [#allocation4], 1

</llo_original>
